<compile_context>
chip_gen: v6e
topology: v6e:2x2x1
jax: 0.10.0
libtpu: 0.0.40
codegen_flags: <defaults>
</compile_context>

<pallas_src>
import jax
import jax.numpy as jnp
from jax.experimental import pallas as pl
from jax.experimental.pallas import tpu as pltpu

_MiB = 1024 * 1024


# ----------------------------------------------------------------------------
# Generation-aware sizing helpers
# ----------------------------------------------------------------------------
def _device_kind() -> str:
    try:
        return jax.devices()[0].device_kind.lower()
    except Exception:
        return ""


def _generation_params():
    """Returns (two_tensorcores, vmem_budget_bytes, vmem_limit_cap, class_tile_cap)."""
    kind = _device_kind()
    is_v7 = "v7" in kind
    if is_v7:
        # v7x: 64 MiB physical VMEM per TensorCore, 2 TCs per chip.
        return True, 36 * _MiB, 48 * _MiB, 64
    # v5e / v6e (and v4/v5p): 128 MiB physical VMEM, single TensorCore.
    # The 16/32 MiB figures are only the default *scoped* limit, which we
    # override explicitly via vmem_limit_bytes below.
    return False, 72 * _MiB, 96 * _MiB, 64


def _padded_rows(rows: int, itemsize: int) -> int:
    # Second-to-last dim of a VMEM tile pads to the sublane packing
    # (8 for f32, 16 for bf16, 32 for int8).
    sub = max(1, (8 * 4) // max(itemsize, 1))
    return ((rows + sub - 1) // sub) * sub


def _footprint_bytes(class_tile, n_ctx, suffix_len, total_len, ctx_dim, itemsize):
    """Double-buffered VMEM footprint of the pipelined blocks for one tile size."""
    per_class_rows = (
        _padded_rows(1, itemsize)            # prefix block rows
        + _padded_rows(suffix_len, itemsize)  # suffix block rows
        + _padded_rows(total_len, itemsize)   # output block rows
    )
    per_step = class_tile * per_class_rows * ctx_dim * itemsize
    per_step += _padded_rows(n_ctx, itemsize) * ctx_dim * itemsize  # shared ctx block
    return 2 * per_step  # input/output blocks are double-buffered by the pipeline


def _pick_class_tile(n_cls, n_ctx, suffix_len, total_len, ctx_dim, itemsize,
                     cap, vmem_budget_bytes, two_tensorcores):
    """Largest class tile <= cap whose double-buffered blocks fit the budget."""
    tile = min(cap, n_cls)
    if two_tensorcores and n_cls >= 2:
        # Only worth shrinking the tile to get >=2 grid steps when the chip
        # actually has 2 TensorCores (v7x); on v5e/v6e it is pure overhead.
        tile = min(tile, pl.cdiv(n_cls, 2))
    while tile > 1 and _footprint_bytes(tile, n_ctx, suffix_len, total_len,
                                        ctx_dim, itemsize) > vmem_budget_bytes:
        tile //= 2
    return max(tile, 1)


# ----------------------------------------------------------------------------
# Kernel
# ----------------------------------------------------------------------------
def _make_prompt_kernel(class_tile: int, n_ctx: int, total_len: int, ctx_dim: int):
    def kernel(prefix_ref, ctx_ref, suffix_ref, out_ref):
        # prefix_ref: (TC, 1, D)     block of class rows
        # ctx_ref:    (n_ctx, D)     shared generic context (same block every step)
        # suffix_ref: (TC, S, D)     block of class rows
        # out_ref:    (TC, L, D)     L = 1 + n_ctx + S
        out_dtype = out_ref.dtype

        # Three direct slice stores -- no tile-sized concat temporary in VMEM,
        # suffix streams read->store, ctx is broadcast at store time only.
        out_ref[:, 0:1, :] = prefix_ref[...].astype(out_dtype)
        out_ref[:, 1:1 + n_ctx, :] = jnp.broadcast_to(
            ctx_ref[...].astype(out_dtype)[None, :, :],
            (class_tile, n_ctx, ctx_dim),
        )
        out_ref[:, 1 + n_ctx:total_len, :] = suffix_ref[...].astype(out_dtype)

    return kernel


# ----------------------------------------------------------------------------
# Wrapper
# ----------------------------------------------------------------------------
def prompt_learner_forward(prefix, ctx, suffix, class_tile=None):
    """Pallas implementation of PromptLearner.forward (position='end').

    prefix: (n_cls, 1, ctx_dim)            frozen SOS token embeddings
    ctx:    (n_ctx, ctx_dim)               learnable generic context
    suffix: (n_cls, suffix_len, ctx_dim)   frozen class-name + EOS embeddings
    returns prompts: (n_cls, 1 + n_ctx + suffix_len, ctx_dim)
    """
    n_cls, one, ctx_dim = prefix.shape
    assert one == 1
    n_ctx, d2 = ctx.shape
    assert d2 == ctx_dim
    n_cls_s, suffix_len, d3 = suffix.shape
    assert n_cls_s == n_cls and d3 == ctx_dim
    total_len = 1 + n_ctx + suffix_len

    # Match torch.cat's dtype-promotion semantics (no silent downcast).
    out_dtype = jnp.result_type(prefix.dtype, ctx.dtype, suffix.dtype)
    itemsize = jnp.dtype(out_dtype).itemsize

    two_tc, vmem_budget, vmem_limit_cap, tile_cap = _generation_params()

    if class_tile is None:
        class_tile = _pick_class_tile(
            n_cls, n_ctx, suffix_len, total_len, ctx_dim, itemsize,
            cap=tile_cap, vmem_budget_bytes=vmem_budget, two_tensorcores=two_tc)
    class_tile = max(1, min(class_tile, n_cls))
    grid = (pl.cdiv(n_cls, class_tile),)

    # Explicit scoped-VMEM limit sized from the actual footprint (with margin),
    # so v5e's 16 MiB default never silently constrains the tile.
    footprint = _footprint_bytes(class_tile, n_ctx, suffix_len, total_len,
                                 ctx_dim, itemsize)
    vmem_limit = int(min(vmem_limit_cap, max(32 * _MiB, footprint * 3 // 2)))

    out_nbytes = n_cls * total_len * ctx_dim * itemsize
    in_nbytes = prefix.size * prefix.dtype.itemsize \
        + ctx.size * ctx.dtype.itemsize \
        + suffix.size * suffix.dtype.itemsize

    kernel = _make_prompt_kernel(class_tile, n_ctx, total_len, ctx_dim)

    out = pl.pallas_call(
        kernel,
        out_shape=jax.ShapeDtypeStruct((n_cls, total_len, ctx_dim), out_dtype),
        grid_spec=pltpu.PrefetchScalarGridSpec(
            num_scalar_prefetch=0,
            grid=grid,
            in_specs=[
                # a tile of class rows of the prefix per grid step
                pl.BlockSpec((class_tile, 1, ctx_dim), lambda i: (i, 0, 0)),
                # shared generic context (same block every step -> fetched once)
                pl.BlockSpec((n_ctx, ctx_dim), lambda i: (0, 0)),
                # a tile of class rows of the suffix per grid step
                pl.BlockSpec((class_tile, suffix_len, ctx_dim), lambda i: (i, 0, 0)),
            ],
            out_specs=pl.BlockSpec((class_tile, total_len, ctx_dim),
                                   lambda i: (i, 0, 0)),
        ),
        compiler_params=pltpu.CompilerParams(
            dimension_semantics=("parallel",),
            vmem_limit_bytes=vmem_limit,
        ),
        cost_estimate=pl.CostEstimate(
            flops=0, transcendentals=0, bytes_accessed=in_nbytes + out_nbytes),
    )(prefix, ctx, suffix)
    return out


def reference_forward(prefix, ctx, suffix):
    n_cls = prefix.shape[0]
    ctx_e = jnp.broadcast_to(ctx[None, :, :], (n_cls,) + ctx.shape)
    return jnp.concatenate([prefix, ctx_e, suffix], axis=1)


if __name__ == "__main__":
    # Small, deterministic shapes consistent with the module:
    #   n_cls classes, n_ctx learnable context tokens, total sequence length L,
    #   ctx_dim transformer width.  (Real CLIP: L=77, ctx_dim=512; scaled down.)
    n_cls = 8
    n_ctx = 4
    total_len = 16
    ctx_dim = 128
    suffix_len = total_len - 1 - n_ctx  # 11

    key = jax.random.PRNGKey(0)
    k_ctx, k_pre, k_suf = jax.random.split(key, 3)

    # ctx ~ nn.init.normal_(std=0.02); prefix/suffix stand in for the frozen
    # CLIP token embeddings (synthetic, deterministic).
    ctx = (0.02 * jax.random.normal(k_ctx, (n_ctx, ctx_dim))).astype(jnp.float32)
    token_prefix = jax.random.normal(k_pre, (n_cls, 1, ctx_dim), dtype=jnp.float32)
    token_suffix = jax.random.normal(k_suf, (n_cls, suffix_len, ctx_dim),
                                     dtype=jnp.float32)

    prompts = prompt_learner_forward(token_prefix, ctx, token_suffix)
    prompts = jax.block_until_ready(prompts)

    expected = reference_forward(token_prefix, ctx, token_suffix)
    assert prompts.shape == (n_cls, total_len, ctx_dim)
    assert prompts.dtype == expected.dtype
    assert jnp.allclose(prompts, expected), "mismatch vs reference"

    print("KERNEL_OK")
</pallas_src>

<mosaic_0001>
module attributes {stable_mosaic.version = 11 : i64} {
  func.func @kernel(%arg0: i32, %arg1: memref<8x1x128xf32, #tpu.memory_space<vmem>>, %arg2: memref<4x128xf32, #tpu.memory_space<vmem>>, %arg3: memref<8x11x128xf32, #tpu.memory_space<vmem>>, %arg4: memref<8x16x128xf32, #tpu.memory_space<vmem>>) attributes {dimension_semantics = [#tpu.dimension_semantics<parallel>], iteration_bounds = array<i64: 1>, scalar_prefetch = 0 : i64, scratch_operands = 0 : i64, tpu.core_type = #tpu.core_type<tc>, window_params = [{transform_indices = @transform_0, window_bounds = array<i64: 8, 1, 128>}, {pipeline_mode = #tpu.pipeline_mode<synchronous>, transform_indices = @transform_1, window_bounds = array<i64: 4, 128>}, {transform_indices = @transform_2, window_bounds = array<i64: 8, 11, 128>}, {transform_indices = @transform_3, window_bounds = array<i64: 8, 16, 128>}]} {
    %c0 = arith.constant 0 : index
    %c0_0 = arith.constant 0 : index
    %c0_1 = arith.constant 0 : index
    %0 = vector.load %arg1[%c0, %c0_0, %c0_1] : memref<8x1x128xf32, #tpu.memory_space<vmem>>, vector<8x1x128xf32>
    %c0_2 = arith.constant 0 : index
    %c0_3 = arith.constant 0 : index
    %c0_4 = arith.constant 0 : index
    %1 = vector.load %arg4[%c0_2, %c0_3, %c0_4] : memref<8x16x128xf32, #tpu.memory_space<vmem>>, vector<8x1x128xf32>
    tpu.vector_store %arg4[%c0_2, %c0_3, %c0_4], %0 {strides = array<i32>} : memref<8x16x128xf32, #tpu.memory_space<vmem>>, vector<8x1x128xf32>,
    %c0_5 = arith.constant 0 : index
    %c0_6 = arith.constant 0 : index
    %2 = vector.load %arg2[%c0_5, %c0_6] : memref<4x128xf32, #tpu.memory_space<vmem>>, vector<4x128xf32>
    %3 = vector.shape_cast %2 : vector<4x128xf32> to vector<1x4x128xf32>
    %4 = vector.shape_cast %3 : vector<1x4x128xf32> to vector<1x4x128xf32>
    %5 = vector.broadcast %4 : vector<1x4x128xf32> to vector<8x4x128xf32>
    %c0_7 = arith.constant 0 : index
    %c1 = arith.constant 1 : index
    %c0_8 = arith.constant 0 : index
    %6 = vector.load %arg4[%c0_7, %c1, %c0_8] : memref<8x16x128xf32, #tpu.memory_space<vmem>>, vector<8x4x128xf32>
    tpu.vector_store %arg4[%c0_7, %c1, %c0_8], %5 {strides = array<i32>} : memref<8x16x128xf32, #tpu.memory_space<vmem>>, vector<8x4x128xf32>,
    %c0_9 = arith.constant 0 : index
    %c0_10 = arith.constant 0 : index
    %c0_11 = arith.constant 0 : index
    %7 = vector.load %arg3[%c0_9, %c0_10, %c0_11] : memref<8x11x128xf32, #tpu.memory_space<vmem>>, vector<8x11x128xf32>
    %c0_12 = arith.constant 0 : index
    %c5 = arith.constant 5 : index
    %c0_13 = arith.constant 0 : index
    %8 = vector.load %arg4[%c0_12, %c5, %c0_13] : memref<8x16x128xf32, #tpu.memory_space<vmem>>, vector<8x11x128xf32>
    tpu.vector_store %arg4[%c0_12, %c5, %c0_13], %7 {strides = array<i32>} : memref<8x16x128xf32, #tpu.memory_space<vmem>>, vector<8x11x128xf32>,
    return
  }
  func.func @transform_0(%arg0: i32) -> (i32, i32, i32) {
    %c0_i32 = arith.constant 0 : i32
    %c0_i32_0 = arith.constant 0 : i32
    %c0_i32_1 = arith.constant 0 : i32
    return %arg0, %c0_i32, %c0_i32_0 : i32, i32, i32
  }
  func.func @transform_1(%arg0: i32) -> (i32, i32) {
    %c0_i32 = arith.constant 0 : i32
    %c0_i32_0 = arith.constant 0 : i32
    %c0_i32_1 = arith.constant 0 : i32
    return %c0_i32, %c0_i32_0 : i32, i32
  }
  func.func @transform_2(%arg0: i32) -> (i32, i32, i32) {
    %c0_i32 = arith.constant 0 : i32
    %c0_i32_0 = arith.constant 0 : i32
    %c0_i32_1 = arith.constant 0 : i32
    return %arg0, %c0_i32, %c0_i32_0 : i32, i32, i32
  }
  func.func @transform_3(%arg0: i32) -> (i32, i32, i32) {
    %c0_i32 = arith.constant 0 : i32
    %c0_i32_0 = arith.constant 0 : i32
    %c0_i32_1 = arith.constant 0 : i32
    return %arg0, %c0_i32, %c0_i32_0 : i32, i32, i32
  }
}

</mosaic_0001>

<llo_original>
// kernel: tpu_custom_call.1
$region0: #{tpu_custom_call.1}
  #allocation0 [shape = 'u32[]', space=smem, size = 0x4, offset = 0x4, fixed_abs, tag = 'smem constant byte address 0x4 - core index']
  #allocation1 [shape = 'u32[144,128]{1,0:T(1,128)}', space=vmem, size = 0x12000, scoped, tag = 'internal scratch']
  %s0 = inlined_call_operand.vmem [shape: f32[8,1,128], index: 0, kind: input, shape index: {}]
  %s1 = inlined_call_operand.vmem [shape: f32[4,128], index: 1, kind: input, shape index: {}]
  %s2 = inlined_call_operand.vmem [shape: f32[8,11,128], index: 2, kind: input, shape index: {}]
  %s3 = inlined_call_operand.hbm [shape: f32[8,16,128], index: 3, kind: output, shape index: {}]
  %s4 = sld [smem:[#allocation0]]
  $region22: #{tpu_custom_call.1} parent=0
    _
  %s6 = ssub.s32 1, %s4
  %s7 = scalar_select 0, %s6, %s4
  $region1: #{tpu_custom_call.1} parent=0
    #allocation2 [shape = 'u8[65536]{0}', space=vmem, size = 0x10000, scoped, tag = 'output window, operand 0, single buffered']
    #allocation3 [shape = 's32[1]{0}', space=sflag, size = 0x4, scoped, tag = 'scoped memory for tpu_custom_call.1']
    %8 = vsyncpa [#allocation3], 0
    // Predicated region
    $region2: #{tpu_custom_call.1} parent=1 // pred_check
      _
    $region3: #{tpu_custom_call.1} parent=1 // pred_check_branch
      %10 = sbr.rel (0) target = $region5
    $region4: #{tpu_custom_call.1} parent=1 // pred_region
      _
    $region5: #{tpu_custom_call.1} parent=1 // pred_fallthru
      _
    // Predicated region
    $region6: #{tpu_custom_call.1} parent=1 // pred_check
      _
    $region7: #{tpu_custom_call.1} parent=1 // pred_check_branch
      %12 = sbr.rel (0) target = $region9
    $region8: #{tpu_custom_call.1} parent=1 // pred_region
      _
    $region9: #{tpu_custom_call.1} parent=1 // pred_fallthru
      _
    // Predicated region
    $region10: #{tpu_custom_call.1} parent=1 // pred_check
      _
    $region11: #{tpu_custom_call.1} parent=1 // pred_check_branch
      %14 = sbr.rel (0) target = $region13
    $region12: #{tpu_custom_call.1} parent=1 // pred_region
      _
    $region13: #{tpu_custom_call.1} parent=1 // pred_fallthru
      _
    %v15 = vld [vmem:[%s0] sm:$0x1]
    %v16 = vld [vmem:[%s0 + $0x1] sm:$0x1]
    %v17 = vld [vmem:[%s0 + $0x2] sm:$0x1]
    %v18 = vld [vmem:[%s0 + $0x3] sm:$0x1]
    %v19 = vld [vmem:[%s0 + $0x4] sm:$0x1]
    %v20 = vld [vmem:[%s0 + $0x5] sm:$0x1]
    %v21 = vld [vmem:[%s0 + $0x6] sm:$0x1]
    %v22 = vld [vmem:[%s0 + $0x7] sm:$0x1]
    %23 = vst [vmem:[#allocation2] sm:$0x1] %v15
    %24 = vst [vmem:[#allocation2 + $0x10] sm:$0x1] %v16
    %25 = vst [vmem:[#allocation2 + $0x20] sm:$0x1] %v17
    %26 = vst [vmem:[#allocation2 + $0x30] sm:$0x1] %v18
    %27 = vst [vmem:[#allocation2 + $0x40] sm:$0x1] %v19
    %28 = vst [vmem:[#allocation2 + $0x50] sm:$0x1] %v20
    %29 = vst [vmem:[#allocation2 + $0x60] sm:$0x1] %v21
    %30 = vst [vmem:[#allocation2 + $0x70] sm:$0x1] %v22
    %v31 = vld [vmem:[%s1] sm:$0xf]
    %32 = vst [vmem:[#allocation2 + $0x1] sm:$0xf] %v31
    %33 = vst [vmem:[#allocation2 + $0x11] sm:$0xf] %v31
    %34 = vst [vmem:[#allocation2 + $0x21] sm:$0xf] %v31
    %35 = vst [vmem:[#allocation2 + $0x31] sm:$0xf] %v31
    %36 = vst [vmem:[#allocation2 + $0x41] sm:$0xf] %v31
    %37 = vst [vmem:[#allocation2 + $0x51] sm:$0xf] %v31
    %38 = vst [vmem:[#allocation2 + $0x61] sm:$0xf] %v31
    %39 = vst [vmem:[#allocation2 + $0x71] sm:$0xf] %v31
    %v40 = vld [vmem:[%s2] sm:$0xff]
    %v41 = vld [vmem:[%s2 + $0x8] sm:$0x7]
    %v42 = vld [vmem:[%s2 + $0x10] sm:$0xff]
    %v43 = vld [vmem:[%s2 + $0x18] sm:$0x7]
    %v44 = vld [vmem:[%s2 + $0x20] sm:$0xff]
    %v45 = vld [vmem:[%s2 + $0x28] sm:$0x7]
    %v46 = vld [vmem:[%s2 + $0x30] sm:$0xff]
    %v47 = vld [vmem:[%s2 + $0x38] sm:$0x7]
    %v48 = vld [vmem:[%s2 + $0x40] sm:$0xff]
    %v49 = vld [vmem:[%s2 + $0x48] sm:$0x7]
    %v50 = vld [vmem:[%s2 + $0x50] sm:$0xff]
    %v51 = vld [vmem:[%s2 + $0x58] sm:$0x7]
    %v52 = vld [vmem:[%s2 + $0x60] sm:$0xff]
    %v53 = vld [vmem:[%s2 + $0x68] sm:$0x7]
    %v54 = vld [vmem:[%s2 + $0x70] sm:$0xff]
    %v55 = vld [vmem:[%s2 + $0x78] sm:$0x7]
    %56 = vst [vmem:[#allocation2 + $0x5] sm:$0xff] %v40
    %57 = vst [vmem:[#allocation2 + $0xd] sm:$0x7] %v41
    %58 = vst [vmem:[#allocation2 + $0x15] sm:$0xff] %v42
    %59 = vst [vmem:[#allocation2 + $0x1d] sm:$0x7] %v43
    %60 = vst [vmem:[#allocation2 + $0x25] sm:$0xff] %v44
    %61 = vst [vmem:[#allocation2 + $0x2d] sm:$0x7] %v45
    %62 = vst [vmem:[#allocation2 + $0x35] sm:$0xff] %v46
    %63 = vst [vmem:[#allocation2 + $0x3d] sm:$0x7] %v47
    %64 = vst [vmem:[#allocation2 + $0x45] sm:$0xff] %v48
    %65 = vst [vmem:[#allocation2 + $0x4d] sm:$0x7] %v49
    %66 = vst [vmem:[#allocation2 + $0x55] sm:$0xff] %v50
    %67 = vst [vmem:[#allocation2 + $0x5d] sm:$0x7] %v51
    %68 = vst [vmem:[#allocation2 + $0x65] sm:$0xff] %v52
    %69 = vst [vmem:[#allocation2 + $0x6d] sm:$0x7] %v53
    %70 = vst [vmem:[#allocation2 + $0x75] sm:$0xff] %v54
    %71 = vst [vmem:[#allocation2 + $0x7d] sm:$0x7] %v55
    // Predicated region
    $region14: #{tpu_custom_call.1} parent=1 // pred_check
      _
    $region15: #{tpu_custom_call.1} parent=1 // pred_check_branch
      %73 = sbr.rel (0) target = $region17
    $region16: #{tpu_custom_call.1} parent=1 // pred_region
      %s75 = ssub.s32 2048, 2048
      %76 = vsyncadd [#allocation3], %s75
      %s77 = sshll.u32 [#allocation2], 4
      %s78 = int_to_ptr.vmem [resolvable:$true] %s77
      %83 = dma.vmem_to_hbm [thread:$0]  %s78, 2048, %s3, [#allocation3], 128, 128, 8
    $region17: #{tpu_custom_call.1} parent=1 // pred_fallthru
      _
    // Predicated region
    $region18: #{tpu_custom_call.1} parent=1 // pred_check
      _
    $region19: #{tpu_custom_call.1} parent=1 // pred_check_branch
      %85 = sbr.rel (0) target = $region21
    $region20: #{tpu_custom_call.1} parent=1 // pred_region
      %86 = dma.done [#allocation3], 2048
    $region21: #{tpu_custom_call.1} parent=1 // pred_fallthru
      _
    %87 = vsyncpa [#allocation3], 1

</llo_original>
